<compile_context>
chip_gen: v6e
topology: v6e:2x2x1
jax: 0.10.0
libtpu: 0.0.40
codegen_flags: <defaults>
</compile_context>

<pallas_src>
import functools

import jax
import jax.numpy as jnp
from jax.experimental import pallas as pl
from jax.experimental.pallas import tpu as pltpu


def _round_up(n, m):
    return (n + m - 1) // m * m


def _vmem_capacity_bytes():
    """Per-core VMEM capacity (v5e/v6e: 128 MiB, v7x: 64 MiB), with fallback."""
    try:
        info = pltpu.get_tpu_info()
        cap = getattr(info, "vmem_capacity_bytes", None)
        if cap:
            return int(cap)
    except Exception:
        pass
    return 64 << 20  # conservative (v7x per-core)


def _choose_tb(batch, row_bytes, weight_bytes, vmem_cap):
    """Largest power-of-two batch tile whose double-buffered tiles fit VMEM,
    while guaranteeing >=2 batch tiles when the batch is big enough (v7x)."""
    budget = max(vmem_cap - weight_bytes - (8 << 20), 4 << 20)
    tb = 1024
    while tb > 8 and 2 * tb * row_bytes > budget:
        tb //= 2
    if batch >= 16:
        # keep at least two tiles so both v7x TensorCores get work
        tb = min(tb, _round_up(-(-batch // 2), 8))
    return max(8, min(tb, _round_up(batch, 8)))


# -----------------------------------------------------------------------------
# Kernel
# -----------------------------------------------------------------------------
def _abxnet_kernel(x_ref, p_ref, wex_ref, wep_ref, be_ref, wd_ref, bd_ref,
                   enc_ref, dec_ref):
    # x_ref: (TB, D_in), p_ref: (TB, 1)
    x = x_ref[...]
    p = p_ref[...]

    # Fused encoder:
    #   cols 0..H-1 : encoded features
    #   col  H      : protected bit pass-through (consumed by the decoder)
    #   col  H+1    : classifier logit (classifier folded into the weights)
    # enc = x @ We_x + p * We_p + be   (MXU matmul + VPU rank-1 term)
    enc = (jnp.dot(x, wex_ref[...], preferred_element_type=jnp.float32)
           + p * wep_ref[...]
           + be_ref[...])
    enc_ref[...] = enc

    # Decoder: dense 128-aligned matmul.  wd's row H is the protected-column
    # row; rows H+1.. (incl. the logit column's row) are zero.
    dec_ref[...] = (jnp.dot(enc, wd_ref[...], preferred_element_type=jnp.float32)
                    + bd_ref[...])


# -----------------------------------------------------------------------------
# One-time weight preparation (hoisted out of forward)
# -----------------------------------------------------------------------------
def prepare_params(params):
    """Pad / fold raw Linear weights into lane-dense kernel operands (run once)."""
    f32 = jnp.float32
    w_enc = jnp.asarray(params["w_enc"], f32)   # (D_in+1, H)
    b_enc = jnp.asarray(params["b_enc"], f32)   # (H,)
    w_dec = jnp.asarray(params["w_dec"], f32)   # (H+1, D_in)
    b_dec = jnp.asarray(params["b_dec"], f32)   # (D_in,)
    w_cls = jnp.asarray(params["w_cls"], f32)   # (H, 1)
    b_cls = jnp.asarray(params["b_cls"], f32)   # (1,)

    d_in = w_enc.shape[0] - 1
    h = w_enc.shape[1]
    h_pad = _round_up(h + 2, 128)   # features | p pass-through | logit | zeros
    d_pad = _round_up(d_in, 128)

    # Folded encoder weight (D_in+1, H_pad)
    we = jnp.zeros((d_in + 1, h_pad), f32)
    we = we.at[:, :h].set(w_enc)
    we = we.at[d_in, h].set(1.0)                      # p pass-through -> col H
    we = we.at[:, h + 1].set((w_enc @ w_cls)[:, 0])   # classifier fold -> col H+1

    be = jnp.zeros((1, h_pad), f32)
    be = be.at[0, :h].set(b_enc)
    be = be.at[0, h + 1].set(b_enc @ w_cls[:, 0] + b_cls[0])

    wex = we[:d_in]                # (D_in, H_pad) — matmul part
    wep = we[d_in:d_in + 1]        # (1,   H_pad) — protected-bit rank-1 part

    # Decoder: rows 0..H-1 = feature rows, row H = protected row, rest zero.
    wd = jnp.zeros((h_pad, d_pad), f32)
    wd = wd.at[:h + 1, :d_in].set(w_dec)
    bd = jnp.zeros((1, d_pad), f32)
    bd = bd.at[0, :d_in].set(b_dec)

    return {"wex": wex, "wep": wep, "be": be, "wd": wd, "bd": bd, "h": h}


# -----------------------------------------------------------------------------
# Forward
# -----------------------------------------------------------------------------
@functools.partial(jax.jit, static_argnames=("h",))
def _abxnet_forward_impl(x, is_protected, wex, wep, be, wd, bd, *, h):
    f32 = jnp.float32
    if is_protected.ndim == 1:
        is_protected = is_protected[:, None]
    p = is_protected.astype(f32)
    x = x.astype(f32)

    B, D_in = x.shape
    H_pad = wex.shape[1]
    D_pad = wd.shape[1]

    row_bytes = 4 * (D_in + 1 + H_pad + D_pad)
    weight_bytes = 4 * (wex.size + wep.size + be.size + wd.size + bd.size)
    vmem_cap = _vmem_capacity_bytes()
    tb = _choose_tb(B, row_bytes, weight_bytes, vmem_cap)
    B_pad = _round_up(B, tb)

    if B_pad != B:
        x = jnp.pad(x, ((0, B_pad - B), (0, 0)))
        p = jnp.pad(p, ((0, B_pad - B), (0, 0)))

    grid = (B_pad // tb,)

    # Resident weights (constant block index, fetched once) + double-buffered
    # batch tiles + small margin; clamp to the physical per-core VMEM.
    vmem_need = weight_bytes + 2 * tb * row_bytes + (2 << 20)
    vmem_limit = int(min(max(vmem_need, 8 << 20), vmem_cap))

    def batch_spec(width):
        return pl.BlockSpec((tb, width), lambda i: (i, 0))

    def resident(shape):
        return pl.BlockSpec(shape, lambda i: (0, 0))

    enc_p, dec_p = pl.pallas_call(
        _abxnet_kernel,
        out_shape=(jax.ShapeDtypeStruct((B_pad, H_pad), f32),   # enc | p | logit
                   jax.ShapeDtypeStruct((B_pad, D_pad), f32)),  # decoded
        grid=grid,
        in_specs=[
            batch_spec(D_in),            # x
            batch_spec(1),               # p
            resident((D_in, H_pad)),     # wex
            resident((1, H_pad)),        # wep
            resident((1, H_pad)),        # be
            resident((H_pad, D_pad)),    # wd
            resident((1, D_pad)),        # bd
        ],
        out_specs=(batch_spec(H_pad), batch_spec(D_pad)),
        compiler_params=pltpu.CompilerParams(
            dimension_semantics=("parallel",),
            vmem_limit_bytes=vmem_limit,
        ),
    )(x, p, wex, wep, be, wd, bd)

    encoded = enc_p[:B, :h]
    decoded = dec_p[:B, :D_in]
    classif_pred = enc_p[:B, h + 1:h + 2]
    return encoded, decoded, classif_pred


def abxnet_forward(x, is_protected, prep):
    """Pallas implementation of ABXNet.forward.

    x:            (B, D_in) float32
    is_protected: (B,) or (B, 1), any numeric/bool dtype
    prep:         output of prepare_params(params)
    returns (encoded, decoded, classif_pred)
    """
    return _abxnet_forward_impl(x, is_protected, prep["wex"], prep["wep"],
                                prep["be"], prep["wd"], prep["bd"],
                                h=prep["h"])


# -----------------------------------------------------------------------------
# Parameters / reference
# -----------------------------------------------------------------------------
def init_params(key, d_in, hidden):
    k = jax.random.split(key, 6)
    s = 0.1
    return {
        "w_enc": s * jax.random.normal(k[0], (d_in + 1, hidden), jnp.float32),
        "b_enc": s * jax.random.normal(k[1], (hidden,), jnp.float32),
        "w_dec": s * jax.random.normal(k[2], (hidden + 1, d_in), jnp.float32),
        "b_dec": s * jax.random.normal(k[3], (d_in,), jnp.float32),
        "w_cls": s * jax.random.normal(k[4], (hidden, 1), jnp.float32),
        "b_cls": s * jax.random.normal(k[5], (1,), jnp.float32),
    }


def _reference_forward(x, is_protected, params):
    """Pure-JAX reference mirroring the PyTorch code (concat-based)."""
    if is_protected.ndim == 1:
        is_protected = is_protected[:, None]
    p = is_protected.astype(jnp.float32)
    xp = jnp.concatenate([x, p], axis=1)
    enc = xp @ params["w_enc"] + params["b_enc"]
    ep = jnp.concatenate([enc, p], axis=1)
    dec = ep @ params["w_dec"] + params["b_dec"]
    cls = enc @ params["w_cls"] + params["b_cls"]
    return enc, dec, cls


if __name__ == "__main__":
    B, D_in, H = 8, 16, 32

    key = jax.random.PRNGKey(0)
    kx, kp, kparam = jax.random.split(key, 3)
    x = jax.random.normal(kx, (B, D_in), jnp.float32)
    is_protected = jax.random.bernoulli(kp, 0.5, (B,)).astype(jnp.int32)
    params = init_params(kparam, D_in, H)

    prep = prepare_params(params)            # one-time weight fold/pad
    enc, dec, cls = abxnet_forward(x, is_protected, prep)
    jax.block_until_ready((enc, dec, cls))

    enc_r, dec_r, cls_r = _reference_forward(x, is_protected, params)
    assert enc.shape == enc_r.shape and dec.shape == dec_r.shape and cls.shape == cls_r.shape
    assert jnp.allclose(enc, enc_r, atol=1e-4), "encoded mismatch"
    assert jnp.allclose(dec, dec_r, atol=1e-4), "decoded mismatch"
    assert jnp.allclose(cls, cls_r, atol=1e-4), "classif_pred mismatch"

    # TODO(synk): batch_loss / abx_loss / valid_abx_loss (data-dependent argmin
    # selection, numpy sampling) are training/eval utilities, not part of
    # forward(); not implemented here.
    print("KERNEL_OK")
</pallas_src>

<mosaic_0001>
module attributes {stable_mosaic.version = 11 : i64} {
  func.func @_abxnet_kernel(%arg0: i32, %arg1: memref<8x16xf32, #tpu.memory_space<vmem>>, %arg2: memref<8x1xf32, #tpu.memory_space<vmem>>, %arg3: memref<16x128xf32, #tpu.memory_space<vmem>>, %arg4: memref<1x128xf32, #tpu.memory_space<vmem>>, %arg5: memref<1x128xf32, #tpu.memory_space<vmem>>, %arg6: memref<128x128xf32, #tpu.memory_space<vmem>>, %arg7: memref<1x128xf32, #tpu.memory_space<vmem>>, %arg8: memref<8x128xf32, #tpu.memory_space<vmem>>, %arg9: memref<8x128xf32, #tpu.memory_space<vmem>>) attributes {dimension_semantics = [#tpu.dimension_semantics<parallel>], iteration_bounds = array<i64: 1>, scalar_prefetch = 0 : i64, scratch_operands = 0 : i64, tpu.core_type = #tpu.core_type<tc>, window_params = [{transform_indices = @transform_0, window_bounds = array<i64: 8, 16>}, {transform_indices = @transform_1, window_bounds = array<i64: 8, 1>}, {pipeline_mode = #tpu.pipeline_mode<synchronous>, transform_indices = @transform_2, window_bounds = array<i64: 16, 128>}, {pipeline_mode = #tpu.pipeline_mode<synchronous>, transform_indices = @transform_3, window_bounds = array<i64: 1, 128>}, {pipeline_mode = #tpu.pipeline_mode<synchronous>, transform_indices = @transform_4, window_bounds = array<i64: 1, 128>}, {pipeline_mode = #tpu.pipeline_mode<synchronous>, transform_indices = @transform_5, window_bounds = array<i64: 128, 128>}, {pipeline_mode = #tpu.pipeline_mode<synchronous>, transform_indices = @transform_6, window_bounds = array<i64: 1, 128>}, {transform_indices = @transform_7, window_bounds = array<i64: 8, 128>}, {transform_indices = @transform_8, window_bounds = array<i64: 8, 128>}]} {
    %c0 = arith.constant 0 : index
    %c0_0 = arith.constant 0 : index
    %0 = vector.load %arg1[%c0, %c0_0] : memref<8x16xf32, #tpu.memory_space<vmem>>, vector<8x16xf32>
    %c0_1 = arith.constant 0 : index
    %c0_2 = arith.constant 0 : index
    %1 = vector.load %arg2[%c0_1, %c0_2] : memref<8x1xf32, #tpu.memory_space<vmem>>, vector<8x1xf32>
    %c0_3 = arith.constant 0 : index
    %c0_4 = arith.constant 0 : index
    %2 = vector.load %arg3[%c0_3, %c0_4] : memref<16x128xf32, #tpu.memory_space<vmem>>, vector<16x128xf32>
    %cst = arith.constant dense<0.000000e+00> : vector<8x128xf32>
    %3 = tpu.matmul %0, %2, %cst {dimension_numbers = #tpu.dot_dimension_numbers<[1], [0], [0], [1], [0, 0, 1, 1], [], []>} : vector<8x16xf32>, vector<16x128xf32>, vector<8x128xf32> -> vector<8x128xf32>
    %c0_5 = arith.constant 0 : index
    %c0_6 = arith.constant 0 : index
    %4 = vector.load %arg4[%c0_5, %c0_6] : memref<1x128xf32, #tpu.memory_space<vmem>>, vector<1x128xf32>
    %5 = vector.broadcast %1 : vector<8x1xf32> to vector<8x128xf32>
    %6 = vector.broadcast %4 : vector<1x128xf32> to vector<8x128xf32>
    %7 = arith.mulf %5, %6 : vector<8x128xf32>
    %8 = arith.addf %3, %7 : vector<8x128xf32>
    %c0_7 = arith.constant 0 : index
    %c0_8 = arith.constant 0 : index
    %9 = vector.load %arg5[%c0_7, %c0_8] : memref<1x128xf32, #tpu.memory_space<vmem>>, vector<1x128xf32>
    %10 = vector.broadcast %9 : vector<1x128xf32> to vector<8x128xf32>
    %11 = arith.addf %8, %10 : vector<8x128xf32>
    %c0_9 = arith.constant 0 : index
    %c0_10 = arith.constant 0 : index
    %12 = vector.load %arg8[%c0_9, %c0_10] : memref<8x128xf32, #tpu.memory_space<vmem>>, vector<8x128xf32>
    tpu.vector_store %arg8[%c0_9, %c0_10], %11 {strides = array<i32>} : memref<8x128xf32, #tpu.memory_space<vmem>>, vector<8x128xf32>,
    %c0_11 = arith.constant 0 : index
    %c0_12 = arith.constant 0 : index
    %13 = vector.load %arg6[%c0_11, %c0_12] : memref<128x128xf32, #tpu.memory_space<vmem>>, vector<128x128xf32>
    %cst_13 = arith.constant dense<0.000000e+00> : vector<8x128xf32>
    %14 = tpu.matmul %11, %13, %cst_13 {dimension_numbers = #tpu.dot_dimension_numbers<[1], [0], [0], [1], [0, 0, 1, 1], [], []>} : vector<8x128xf32>, vector<128x128xf32>, vector<8x128xf32> -> vector<8x128xf32>
    %c0_14 = arith.constant 0 : index
    %c0_15 = arith.constant 0 : index
    %15 = vector.load %arg7[%c0_14, %c0_15] : memref<1x128xf32, #tpu.memory_space<vmem>>, vector<1x128xf32>
    %16 = vector.broadcast %15 : vector<1x128xf32> to vector<8x128xf32>
    %17 = arith.addf %14, %16 : vector<8x128xf32>
    %c0_16 = arith.constant 0 : index
    %c0_17 = arith.constant 0 : index
    %18 = vector.load %arg9[%c0_16, %c0_17] : memref<8x128xf32, #tpu.memory_space<vmem>>, vector<8x128xf32>
    tpu.vector_store %arg9[%c0_16, %c0_17], %17 {strides = array<i32>} : memref<8x128xf32, #tpu.memory_space<vmem>>, vector<8x128xf32>,
    return
  }
  func.func @transform_0(%arg0: i32) -> (i32, i32) {
    %c0_i32 = arith.constant 0 : i32
    %c0_i32_0 = arith.constant 0 : i32
    return %arg0, %c0_i32 : i32, i32
  }
  func.func @transform_1(%arg0: i32) -> (i32, i32) {
    %c0_i32 = arith.constant 0 : i32
    %c0_i32_0 = arith.constant 0 : i32
    return %arg0, %c0_i32 : i32, i32
  }
  func.func @transform_2(%arg0: i32) -> (i32, i32) {
    %c0_i32 = arith.constant 0 : i32
    %c0_i32_0 = arith.constant 0 : i32
    %c0_i32_1 = arith.constant 0 : i32
    return %c0_i32, %c0_i32_0 : i32, i32
  }
  func.func @transform_3(%arg0: i32) -> (i32, i32) {
    %c0_i32 = arith.constant 0 : i32
    %c0_i32_0 = arith.constant 0 : i32
    %c0_i32_1 = arith.constant 0 : i32
    return %c0_i32, %c0_i32_0 : i32, i32
  }
  func.func @transform_4(%arg0: i32) -> (i32, i32) {
    %c0_i32 = arith.constant 0 : i32
    %c0_i32_0 = arith.constant 0 : i32
    %c0_i32_1 = arith.constant 0 : i32
    return %c0_i32, %c0_i32_0 : i32, i32
  }
  func.func @transform_5(%arg0: i32) -> (i32, i32) {
    %c0_i32 = arith.constant 0 : i32
    %c0_i32_0 = arith.constant 0 : i32
    %c0_i32_1 = arith.constant 0 : i32
    return %c0_i32, %c0_i32_0 : i32, i32
  }
  func.func @transform_6(%arg0: i32) -> (i32, i32) {
    %c0_i32 = arith.constant 0 : i32
    %c0_i32_0 = arith.constant 0 : i32
    %c0_i32_1 = arith.constant 0 : i32
    return %c0_i32, %c0_i32_0 : i32, i32
  }
  func.func @transform_7(%arg0: i32) -> (i32, i32) {
    %c0_i32 = arith.constant 0 : i32
    %c0_i32_0 = arith.constant 0 : i32
    return %arg0, %c0_i32 : i32, i32
  }
  func.func @transform_8(%arg0: i32) -> (i32, i32) {
    %c0_i32 = arith.constant 0 : i32
    %c0_i32_0 = arith.constant 0 : i32
    return %arg0, %c0_i32 : i32, i32
  }
}

</mosaic_0001>

<llo_original>
// kernel: _abxnet_forward_impl.1
$region0: #{_abxnet_forward_impl.1}
  #allocation0 [shape = 'u32[]', space=smem, size = 0x4, offset = 0x4, fixed_abs, tag = 'smem constant byte address 0x4 - core index']
  #allocation1 [shape = 'u32[144,128]{1,0:T(1,128)}', space=vmem, size = 0x12000, scoped, tag = 'internal scratch']
  %s0 = inlined_call_operand.vmem [shape: f32[8,16], index: 0, kind: input, shape index: {}]
  %s1 = inlined_call_operand.vmem [shape: f32[8,1], index: 1, kind: input, shape index: {}]
  %s2 = inlined_call_operand.hbm [shape: f32[16,128], index: 2, kind: input, shape index: {}]
  %s3 = inlined_call_operand.vmem [shape: f32[1,128], index: 3, kind: input, shape index: {}]
  %s4 = inlined_call_operand.vmem [shape: f32[1,128], index: 4, kind: input, shape index: {}]
  %s5 = inlined_call_operand.hbm [shape: f32[128,128], index: 5, kind: input, shape index: {}]
  %s6 = inlined_call_operand.vmem [shape: f32[1,128], index: 6, kind: input, shape index: {}]
  %s7 = inlined_call_operand.vmem [shape: f32[8,128], index: 7, kind: output, shape index: {0}]
  %s8 = inlined_call_operand.hbm [shape: f32[8,128], index: 8, kind: output, shape index: {1}]
  %9 = xla_tuple %s7, %s8
  %s10 = sld [smem:[#allocation0]]
  $region54: #{_abxnet_forward_impl.1} parent=0
    _
  %s12 = ssub.s32 1, %s10
  %s13 = scalar_select 0, %s12, %s10
  $region1: #{_abxnet_forward_impl.1} parent=0
    #allocation2 [shape = 'u8[8192]{0}', space=vmem, size = 0x2000, scoped, tag = 'input window, operand 2, single buffered']
    #allocation3 [shape = 's32[1]{0}', space=sflag, size = 0x4, scoped, tag = 'scoped memory for _abxnet_forward_impl.1']
    #allocation4 [shape = 's32[1]{0}', space=sflag, size = 0x4, scoped, tag = 'scoped memory for _abxnet_forward_impl.1']
    #allocation5 [shape = 'u8[65536]{0}', space=vmem, size = 0x10000, scoped, tag = 'input window, operand 5, single buffered']
    #allocation6 [shape = 's32[1]{0}', space=sflag, size = 0x4, scoped, tag = 'scoped memory for _abxnet_forward_impl.1']
    #allocation7 [shape = 'u8[4096]{0}', space=vmem, size = 0x1000, scoped, tag = 'output window, operand 1, single buffered']
    %14 = vsyncpa [#allocation3], 0
    %15 = vsyncpa [#allocation6], 0
    %16 = vsyncpa [#allocation4], 0
    // Predicated region
    $region2: #{_abxnet_forward_impl.1} parent=1 // pred_check
      _
    $region3: #{_abxnet_forward_impl.1} parent=1 // pred_check_branch
      %18 = sbr.rel (0) target = $region5
    $region4: #{_abxnet_forward_impl.1} parent=1 // pred_region
      _
    $region5: #{_abxnet_forward_impl.1} parent=1 // pred_fallthru
      _
    // Predicated region
    $region6: #{_abxnet_forward_impl.1} parent=1 // pred_check
      _
    $region7: #{_abxnet_forward_impl.1} parent=1 // pred_check_branch
      %20 = sbr.rel (0) target = $region9
    $region8: #{_abxnet_forward_impl.1} parent=1 // pred_region
      _
    $region9: #{_abxnet_forward_impl.1} parent=1 // pred_fallthru
      _
    // Predicated region
    $region10: #{_abxnet_forward_impl.1} parent=1 // pred_check
      _
    $region11: #{_abxnet_forward_impl.1} parent=1 // pred_check_branch
      %22 = sbr.rel (0) target = $region13
    $region12: #{_abxnet_forward_impl.1} parent=1 // pred_region
      %s24 = ssub.s32 256, 256
      %25 = vsyncadd [#allocation3], %s24
      %s26 = sshll.u32 [#allocation2], 4
      %s27 = int_to_ptr.vmem [resolvable:$true] %s26
      %32 = dma.hbm_to_vmem [thread:$0]  %s2, 256, %s27, [#allocation3], 128, 128, 8
    $region13: #{_abxnet_forward_impl.1} parent=1 // pred_fallthru
      _
    // Predicated region
    $region14: #{_abxnet_forward_impl.1} parent=1 // pred_check
      _
    $region15: #{_abxnet_forward_impl.1} parent=1 // pred_check_branch
      %34 = sbr.rel (0) target = $region17
    $region16: #{_abxnet_forward_impl.1} parent=1 // pred_region
      _
    $region17: #{_abxnet_forward_impl.1} parent=1 // pred_fallthru
      _
    // Predicated region
    $region18: #{_abxnet_forward_impl.1} parent=1 // pred_check
      _
    $region19: #{_abxnet_forward_impl.1} parent=1 // pred_check_branch
      %36 = sbr.rel (0) target = $region21
    $region20: #{_abxnet_forward_impl.1} parent=1 // pred_region
      _
    $region21: #{_abxnet_forward_impl.1} parent=1 // pred_fallthru
      _
    // Predicated region
    $region22: #{_abxnet_forward_impl.1} parent=1 // pred_check
      _
    $region23: #{_abxnet_forward_impl.1} parent=1 // pred_check_branch
      %38 = sbr.rel (0) target = $region25
    $region24: #{_abxnet_forward_impl.1} parent=1 // pred_region
      %s40 = ssub.s32 2048, 2048
      %41 = vsyncadd [#allocation6], %s40
      %s42 = sshll.u32 [#allocation5], 4
      %s43 = int_to_ptr.vmem [resolvable:$true] %s42
      %48 = dma.hbm_to_vmem [thread:$0]  %s5, 2048, %s43, [#allocation6], 128, 128, 8
    $region25: #{_abxnet_forward_impl.1} parent=1 // pred_fallthru
      _
    // Predicated region
    $region26: #{_abxnet_forward_impl.1} parent=1 // pred_check
      _
    $region27: #{_abxnet_forward_impl.1} parent=1 // pred_check_branch
      %50 = sbr.rel (0) target = $region29
    $region28: #{_abxnet_forward_impl.1} parent=1 // pred_region
      _
    $region29: #{_abxnet_forward_impl.1} parent=1 // pred_fallthru
      _
    // Predicated region
    $region30: #{_abxnet_forward_impl.1} parent=1 // pred_check
      _
    $region31: #{_abxnet_forward_impl.1} parent=1 // pred_check_branch
      %52 = sbr.rel (0) target = $region33
    $region32: #{_abxnet_forward_impl.1} parent=1 // pred_region
      %53 = dma.done [#allocation3], 256
    $region33: #{_abxnet_forward_impl.1} parent=1 // pred_fallthru
      _
    // Predicated region
    $region34: #{_abxnet_forward_impl.1} parent=1 // pred_check
      _
    $region35: #{_abxnet_forward_impl.1} parent=1 // pred_check_branch
      %55 = sbr.rel (0) target = $region37
    $region36: #{_abxnet_forward_impl.1} parent=1 // pred_region
      %56 = dma.done [#allocation6], 2048
    $region37: #{_abxnet_forward_impl.1} parent=1 // pred_fallthru
      _
    %v57 = vld [vmem:[%s0] sm:$0xff]
    %v58 = vld [vmem:[%s1] sm:$0xff]
    %v59 = vld [vmem:[#allocation2] sm:$0xff]
    %v60 = vld [vmem:[#allocation2 + $0x8] sm:$0xff]
    %v61 = vld [vmem:[%s3] sm:$0x1]
    %63 = vset.pattern.permute.xlu0 0
    %64 = vperm.xlu0 %63, %v58
    %v65 = vpop.permute.xlu0 %64
    %v68 = vlaneseq
    %v69 = vshrl.u32 %v68, 7
    %v70 = vsub.s32 0, %v69
    %v71 = vrot.slane %v61, %v70
    %v73 = vmul.f32 %v65, %v71
    %vm74 = vcmask 130048
    %v76 = vsel %vm74, %v57, 0
    %78 = vmatprep.subr.mxu0 0.0
    %79 = vmatpush1.msra.mxu0 0.0
    %80 = vmatprep.subr.mxu0 0.0
    %81 = vmatpush1.msra.mxu0 0.0
    %82 = vmatprep.subr.mxu0 0.0
    %83 = vmatpush1.msra.mxu0 0.0
    %84 = vmatprep.subr.mxu0 0.0
    %85 = vmatpush1.msra.mxu0 0.0
    %86 = vmatprep.subr.mxu0 0.0
    %87 = vmatpush1.msra.mxu0 0.0
    %88 = vmatprep.subr.mxu0 0.0
    %89 = vmatpush1.msra.mxu0 0.0
    %90 = vmatprep.subr.mxu0 0.0
    %91 = vmatpush1.msra.mxu0 0.0
    %92 = vmatprep.subr.mxu0 0.0
    %93 = vmatpush1.msra.mxu0 0.0
    %94 = vmatprep.subr.mxu0 0.0
    %95 = vmatpush1.msra.mxu0 0.0
    %96 = vmatprep.subr.mxu0 0.0
    %97 = vmatpush1.msra.mxu0 0.0
    %98 = vmatprep.subr.mxu0 0.0
    %99 = vmatpush1.msra.mxu0 0.0
    %100 = vmatprep.subr.mxu0 0.0
    %101 = vmatpush1.msra.mxu0 0.0
    %102 = vmatprep.subr.mxu0 0.0
    %103 = vmatpush1.msra.mxu0 0.0
    %104 = vmatprep.subr.mxu0 0.0
    %105 = vmatpush1.msra.mxu0 0.0
    %106 = vmatprep.subr.mxu0 0.0
    %107 = vmatpush1.msra.mxu0 %v60
    %108 = vmatprep.subr.mxu0 0.0
    %109 = vmatpush1.msra.mxu0 %v59
    %110 = vmatprep.subr.mxu0 0.0
    %111 = vmatpush2.msra.mxu0 0.0
    %112 = vmatprep.subr.mxu0 0.0
    %113 = vmatpush2.msra.mxu0 0.0
    %114 = vmatprep.subr.mxu0 0.0
    %115 = vmatpush2.msra.mxu0 0.0
    %116 = vmatprep.subr.mxu0 0.0
    %117 = vmatpush2.msra.mxu0 0.0
    %118 = vmatprep.subr.mxu0 0.0
    %119 = vmatpush2.msra.mxu0 0.0
    %120 = vmatprep.subr.mxu0 0.0
    %121 = vmatpush2.msra.mxu0 0.0
    %122 = vmatprep.subr.mxu0 0.0
    %123 = vmatpush2.msra.mxu0 0.0
    %124 = vmatprep.subr.mxu0 0.0
    %125 = vmatpush2.msra.mxu0 0.0
    %126 = vmatprep.subr.mxu0 0.0
    %127 = vmatpush2.msra.mxu0 0.0
    %128 = vmatprep.subr.mxu0 0.0
    %129 = vmatpush2.msra.mxu0 0.0
    %130 = vmatprep.subr.mxu0 0.0
    %131 = vmatpush2.msra.mxu0 0.0
    %132 = vmatprep.subr.mxu0 0.0
    %133 = vmatpush2.msra.mxu0 0.0
    %134 = vmatprep.subr.mxu0 0.0
    %135 = vmatpush2.msra.mxu0 0.0
    %136 = vmatprep.subr.mxu0 0.0
    %137 = vmatpush2.msra.mxu0 0.0
    %138 = vmatprep.subr.mxu0 0.0
    %139 = vmatpush2.msra.mxu0 0.0
    %140 = vmatprep.subr.mxu0 0.0
    %141 = vmatpush2.msra.mxu0 0.0
    %142 = vmatprep.mubr.f32.mxu0 0.0
    %143 = vmatmul.mubr.f32.gmra.mxu0 %v76
    %v144 = vpop.f32.mrf.mxu0
    %v145 = vadd.f32 %v73, %v144
    %v146 = vpop.f32.mrf.mxu0
    %147 = vdwg.mxu0
    %v148 = vld [vmem:[%s4] sm:$0x1]
    %v150 = vlaneseq
    %v151 = vshrl.u32 %v150, 7
    %v152 = vsub.s32 0, %v151
    %v153 = vrot.slane %v148, %v152
    %v155 = vadd.f32 %v145, %v153
    %156 = vst [vmem:[%s7] sm:$0xff] %v155
    %v157 = vld [vmem:[#allocation5] sm:$0xff]
    %v158 = vld [vmem:[#allocation5 + $0x8] sm:$0xff]
    %v159 = vld [vmem:[#allocation5 + $0x10] sm:$0xff]
    %v160 = vld [vmem:[#allocation5 + $0x18] sm:$0xff]
    %v161 = vld [vmem:[#allocation5 + $0x20] sm:$0xff]
    %v162 = vld [vmem:[#allocation5 + $0x28] sm:$0xff]
    %v163 = vld [vmem:[#allocation5 + $0x30] sm:$0xff]
    %v164 = vld [vmem:[#allocation5 + $0x38] sm:$0xff]
    %v165 = vld [vmem:[#allocation5 + $0x40] sm:$0xff]
    %v166 = vld [vmem:[#allocation5 + $0x48] sm:$0xff]
    %v167 = vld [vmem:[#allocation5 + $0x50] sm:$0xff]
    %v168 = vld [vmem:[#allocation5 + $0x58] sm:$0xff]
    %v169 = vld [vmem:[#allocation5 + $0x60] sm:$0xff]
    %v170 = vld [vmem:[#allocation5 + $0x68] sm:$0xff]
    %v171 = vld [vmem:[#allocation5 + $0x70] sm:$0xff]
    %v172 = vld [vmem:[#allocation5 + $0x78] sm:$0xff]
    %v173 = vld [vmem:[%s6] sm:$0x1]
    %v175 = vlaneseq
    %v176 = vshrl.u32 %v175, 7
    %v177 = vsub.s32 0, %v176
    %v178 = vrot.slane %v173, %v177
    %180 = vmatprep.subr.mxu0 0.0
    %181 = vmatpush1.msra.mxu0 %v172
    %182 = vmatprep.subr.mxu0 0.0
    %183 = vmatpush1.msra.mxu0 %v171
    %184 = vmatprep.subr.mxu0 0.0
    %185 = vmatpush1.msra.mxu0 %v170
    %186 = vmatprep.subr.mxu0 0.0
    %187 = vmatpush1.msra.mxu0 %v169
    %188 = vmatprep.subr.mxu0 0.0
    %189 = vmatpush1.msra.mxu0 %v168
    %190 = vmatprep.subr.mxu0 0.0
    %191 = vmatpush1.msra.mxu0 %v167
    %192 = vmatprep.subr.mxu0 0.0
    %193 = vmatpush1.msra.mxu0 %v166
    %194 = vmatprep.subr.mxu0 0.0
    %195 = vmatpush1.msra.mxu0 %v165
    %196 = vmatprep.subr.mxu0 0.0
    %197 = vmatpush1.msra.mxu0 %v164
    %198 = vmatprep.subr.mxu0 0.0
    %199 = vmatpush1.msra.mxu0 %v163
    %200 = vmatprep.subr.mxu0 0.0
    %201 = vmatpush1.msra.mxu0 %v162
    %202 = vmatprep.subr.mxu0 0.0
    %203 = vmatpush1.msra.mxu0 %v161
    %204 = vmatprep.subr.mxu0 0.0
    %205 = vmatpush1.msra.mxu0 %v160
    %206 = vmatprep.subr.mxu0 0.0
    %207 = vmatpush1.msra.mxu0 %v159
    %208 = vmatprep.subr.mxu0 0.0
    %209 = vmatpush1.msra.mxu0 %v158
    %210 = vmatprep.subr.mxu0 0.0
    %211 = vmatpush1.msra.mxu0 %v157
    %212 = vmatprep.subr.mxu0 0.0
    %213 = vmatpush2.msra.mxu0 0.0
    %214 = vmatprep.subr.mxu0 0.0
    %215 = vmatpush2.msra.mxu0 0.0
    %216 = vmatprep.subr.mxu0 0.0
    %217 = vmatpush2.msra.mxu0 0.0
    %218 = vmatprep.subr.mxu0 0.0
    %219 = vmatpush2.msra.mxu0 0.0
    %220 = vmatprep.subr.mxu0 0.0
    %221 = vmatpush2.msra.mxu0 0.0
    %222 = vmatprep.subr.mxu0 0.0
    %223 = vmatpush2.msra.mxu0 0.0
    %224 = vmatprep.subr.mxu0 0.0
    %225 = vmatpush2.msra.mxu0 0.0
    %226 = vmatprep.subr.mxu0 0.0
    %227 = vmatpush2.msra.mxu0 0.0
    %228 = vmatprep.subr.mxu0 0.0
    %229 = vmatpush2.msra.mxu0 0.0
    %230 = vmatprep.subr.mxu0 0.0
    %231 = vmatpush2.msra.mxu0 0.0
    %232 = vmatprep.subr.mxu0 0.0
    %233 = vmatpush2.msra.mxu0 0.0
    %234 = vmatprep.subr.mxu0 0.0
    %235 = vmatpush2.msra.mxu0 0.0
    %236 = vmatprep.subr.mxu0 0.0
    %237 = vmatpush2.msra.mxu0 0.0
    %238 = vmatprep.subr.mxu0 0.0
    %239 = vmatpush2.msra.mxu0 0.0
    %240 = vmatprep.subr.mxu0 0.0
    %241 = vmatpush2.msra.mxu0 0.0
    %242 = vmatprep.subr.mxu0 0.0
    %243 = vmatpush2.msra.mxu0 0.0
    %244 = vmatprep.mubr.f32.mxu0 0.0
    %245 = vmatmul.mubr.f32.gmra.mxu0 %v155
    %v246 = vpop.f32.mrf.mxu0
    %v247 = vadd.f32 %v178, %v246
    %v248 = vpop.f32.mrf.mxu0
    %249 = vdwg.mxu0
    %250 = vst [vmem:[#allocation7] sm:$0xff] %v247
    // Predicated region
    $region38: #{_abxnet_forward_impl.1} parent=1 // pred_check
      _
    $region39: #{_abxnet_forward_impl.1} parent=1 // pred_check_branch
      %252 = sbr.rel (0) target = $region41
    $region40: #{_abxnet_forward_impl.1} parent=1 // pred_region
      _
    $region41: #{_abxnet_forward_impl.1} parent=1 // pred_fallthru
      _
    // Predicated region
    $region42: #{_abxnet_forward_impl.1} parent=1 // pred_check
      _
    $region43: #{_abxnet_forward_impl.1} parent=1 // pred_check_branch
      %254 = sbr.rel (0) target = $region45
    $region44: #{_abxnet_forward_impl.1} parent=1 // pred_region
      %s256 = ssub.s32 128, 128
      %257 = vsyncadd [#allocation4], %s256
      %s259 = sshll.u32 [#allocation7], 4
      %s260 = int_to_ptr.vmem [resolvable:$true] %s259
      %262 = dma.vmem_to_hbm [thread:$0]  %s260, 128, %s8, [#allocation4]
    $region45: #{_abxnet_forward_impl.1} parent=1 // pred_fallthru
      _
    // Predicated region
    $region46: #{_abxnet_forward_impl.1} parent=1 // pred_check
      _
    $region47: #{_abxnet_forward_impl.1} parent=1 // pred_check_branch
      %264 = sbr.rel (0) target = $region49
    $region48: #{_abxnet_forward_impl.1} parent=1 // pred_region
      _
    $region49: #{_abxnet_forward_impl.1} parent=1 // pred_fallthru
      _
    // Predicated region
    $region50: #{_abxnet_forward_impl.1} parent=1 // pred_check
      _
    $region51: #{_abxnet_forward_impl.1} parent=1 // pred_check_branch
      %266 = sbr.rel (0) target = $region53
    $region52: #{_abxnet_forward_impl.1} parent=1 // pred_region
      %267 = dma.done [#allocation4], 128
    $region53: #{_abxnet_forward_impl.1} parent=1 // pred_fallthru
      _
    %268 = vsyncpa [#allocation3], 1
    %269 = vsyncpa [#allocation6], 1
    %270 = vsyncpa [#allocation4], 1

</llo_original>
